<compile_context>
chip_gen: v5e
topology: v5e:2x2
jax: 0.10.0
libtpu: 0.0.40
codegen_flags: <defaults>
</compile_context>

<pallas_src>
import functools

import jax
import jax.numpy as jnp
import numpy as np
from jax import lax
from jax.experimental import pallas as pl
from jax.experimental.pallas import tpu as pltpu

_MIB = 1024 * 1024


def _block_kernel(L, mask_x, x_ref, s_ref, w1_ref, w2_ref, b1_ref, b2_ref, o_ref):
    """One (batch, L-tile) step.

    x_ref : (1, C, Lt)      f32   input tile (length-tile t of batch b)
    s_ref : (1, 1, C, 6)    f32   halos: [:, :3]=x[base-3:base], [:, 3:]=x[base+Lt:base+Lt+3]
    w1_ref: (3, Cout, C)    bf16  conv1 taps, bn1 (eval) scale folded in
    w2_ref: (3, Cout, Cout) bf16  conv2 taps, bn2 (eval) scale folded in
    b1/b2 : (Cout, 1)       f32   folded BN shifts
    o_ref : (1, Cout, Lt)   f32   output tile, already in final (B, C, L) layout
    """
    C = x_ref.shape[1]
    Cout = o_ref.shape[1]
    Lt = o_ref.shape[2]
    Wh = Lt + 4                       # h is needed on a +/-2 halo for the dilated conv2
    base = pl.program_id(1) * Lt      # global position of this tile's first output

    xt = x_ref[0]                     # (C, Lt) f32 — also the residual/identity path
    st = s_ref[0, 0]                  # (C, 6)  f32 halos (pre-zeroed outside [0, L))

    # Assemble the (C, Lt+6) window covering positions [base-3, base+Lt+3).
    xw = jnp.concatenate([st[:, 0:3], xt, st[:, 3:6]], axis=1)
    if mask_x:
        # Only when L % Lt != 0: the partial edge block leaves stale lanes beyond L,
        # which must read as conv1's zero padding.
        posx = lax.broadcasted_iota(jnp.int32, (C, Lt + 6), 1) + (base - 3)
        xw = jnp.where((posx >= 0) & (posx < L), xw, 0.0)
    xwb = xw.astype(jnp.bfloat16)

    # --- conv1 (k=3, stride=1, pad=1, no bias) + bn1 scale (folded) ---
    # Three accumulating per-tap MXU dots, bf16 operands, f32 accumulation.
    h = jnp.dot(w1_ref[0], xwb[:, 0:Wh], preferred_element_type=jnp.float32)
    h = h + jnp.dot(w1_ref[1], xwb[:, 1:1 + Wh], preferred_element_type=jnp.float32)
    h = h + jnp.dot(w1_ref[2], xwb[:, 2:2 + Wh], preferred_element_type=jnp.float32)

    # --- bn1 shift + relu (dropout p=0.1 is a no-op in eval mode) ---
    h = jnp.maximum(h + b1_ref[...], 0.0)

    # conv2's zero padding (pad=2) at the sequence ends; also neutralizes halo lanes.
    posh = lax.broadcasted_iota(jnp.int32, (Cout, Wh), 1) + (base - 2)
    h = jnp.where((posh >= 0) & (posh < L), h, 0.0)
    hb = h.astype(jnp.bfloat16)

    # --- conv2 (k=3, stride=1, pad=2, dilation=2, no bias) + bn2 scale (folded) ---
    y = jnp.dot(w2_ref[0], hb[:, 0:Lt], preferred_element_type=jnp.float32)
    y = y + jnp.dot(w2_ref[1], hb[:, 2:2 + Lt], preferred_element_type=jnp.float32)
    y = y + jnp.dot(w2_ref[2], hb[:, 4:4 + Lt], preferred_element_type=jnp.float32)

    # --- bn2 shift + residual add + relu ---
    o_ref[0] = jnp.maximum(y + b2_ref[...] + xt, 0.0)


def _vmem_capacity_bytes():
    try:
        return int(pltpu.get_tpu_info().vmem_capacity_bytes)
    except Exception:
        return 64 * _MIB              # conservative (v7x-sized) fallback


def _tile_plan(C, L, lt_user):
    """Pick the length tile Lt, number of tiles NT and a consistent VMEM limit.

    Per-step footprint ~= 16*C*Lt (double-buffered in+out f32) + ~32*C*Lt of in-kernel
    temporaries (window, bf16 casts, h, masks) -> budget against ~48*C*Lt bytes.
    """
    cap = _vmem_capacity_bytes()
    if lt_user is None:
        budget = int(cap * 0.40)
        lt = max(128, min((budget // (48 * C)) // 128 * 128, 8192))
    else:
        lt = max(128, (int(lt_user) // 128) * 128)
    if L <= lt:
        Lt, NT = L, 1
    else:
        Lt, NT = lt, -(-L // lt)
    need = 48 * C * Lt
    vmem_limit = min(cap - 8 * _MIB, max(32 * _MIB, (3 * need) // 2 + 8 * _MIB))
    return Lt, NT, vmem_limit


def _halo_strips(x, Lt, NT, L):
    """(B, NT, C, 6): [..., :3] = x[t*Lt-3 : t*Lt], [..., 3:] = x[t*Lt+Lt : t*Lt+Lt+3],
    zero-filled outside [0, L).  Size is ~6/Lt of the input (negligible HBM traffic)."""
    B, C, _ = x.shape
    starts = np.arange(NT) * Lt
    offs = np.concatenate([np.arange(-3, 0), Lt + np.arange(0, 3)])
    idx = starts[:, None] + offs[None, :]                      # (NT, 6)
    valid = (idx >= 0) & (idx < L)
    idx_c = np.clip(idx, 0, L - 1).reshape(-1)
    g = jnp.take(x, jnp.asarray(idx_c, dtype=jnp.int32), axis=2)          # (B, C, NT*6)
    g = jnp.where(jnp.asarray(valid.reshape(-1))[None, None, :], g, 0.0)
    return jnp.transpose(g.reshape(B, C, NT, 6), (0, 2, 1, 3))            # (B, NT, C, 6)


@functools.partial(jax.jit, static_argnames=("lt",))
def resnet_basic_block_wav1d(x, w1, w2,
                             bn1_gamma, bn1_beta, bn1_mean, bn1_var,
                             bn2_gamma, bn2_beta, bn2_mean, bn2_var,
                             eps=1e-5, lt=None):
    """x: (B, C, L) float32. stride=1, downsample=None (requires inplanes==planes)."""
    B, C, L = x.shape
    Cout = w1.shape[0]
    assert Cout == C, "residual path requires inplanes == planes when downsample=None"
    x = x.astype(jnp.float32)

    # ---- fold eval-mode BatchNorm into the conv weights (scale) + a shift ----
    inv1 = (bn1_gamma / jnp.sqrt(bn1_var + eps)).astype(jnp.float32)
    inv2 = (bn2_gamma / jnp.sqrt(bn2_var + eps)).astype(jnp.float32)
    b1 = (bn1_beta - bn1_mean * inv1).reshape(Cout, 1).astype(jnp.float32)
    b2 = (bn2_beta - bn2_mean * inv2).reshape(Cout, 1).astype(jnp.float32)

    # Per-tap (3, Cout, Cin) weights with the BN scale folded in; bf16 for the MXU.
    w1k = jnp.transpose(inv1[:, None, None] * w1, (2, 0, 1)).astype(jnp.bfloat16)
    w2k = jnp.transpose(inv2[:, None, None] * w2, (2, 0, 1)).astype(jnp.bfloat16)

    # ---- length tiling (no halo materialization of the bulk input) ----
    Lt, NT, vmem_limit = _tile_plan(C, L, lt)
    strips = _halo_strips(x, Lt, NT, L)
    mask_x = (L % Lt) != 0            # static: only the partial edge block needs masking

    grid_spec = pltpu.PrefetchScalarGridSpec(
        num_scalar_prefetch=0,
        grid=(B, NT),
        in_specs=[
            pl.BlockSpec((1, C, Lt), lambda b, t: (b, 0, t)),        # x tile (read once)
            pl.BlockSpec((1, 1, C, 6), lambda b, t: (b, t, 0, 0)),   # halo strip
            pl.BlockSpec((3, Cout, C), lambda b, t: (0, 0, 0)),      # conv1 taps (scaled)
            pl.BlockSpec((3, Cout, Cout), lambda b, t: (0, 0, 0)),   # conv2 taps (scaled)
            pl.BlockSpec((Cout, 1), lambda b, t: (0, 0)),            # bn1 shift
            pl.BlockSpec((Cout, 1), lambda b, t: (0, 0)),            # bn2 shift
        ],
        out_specs=pl.BlockSpec((1, Cout, Lt), lambda b, t: (b, 0, t)),
    )

    return pl.pallas_call(
        functools.partial(_block_kernel, L, mask_x),
        out_shape=jax.ShapeDtypeStruct((B, Cout, L), jnp.float32),
        grid_spec=grid_spec,
        compiler_params=pltpu.CompilerParams(
            dimension_semantics=("parallel", "parallel"),
            vmem_limit_bytes=vmem_limit,
        ),
    )(x, strips, w1k, w2k, b1, b2)


# ---------------------------- pure-JAX references ----------------------------

def _conv1d(x, w, pad, dil):
    dn = lax.conv_dimension_numbers(x.shape, w.shape, ('NCH', 'OIH', 'NCH'))
    return lax.conv_general_dilated(x, w, window_strides=(1,), padding=[(pad, pad)],
                                    rhs_dilation=(dil,), dimension_numbers=dn,
                                    precision=lax.Precision.HIGHEST)


def _ref_forward(x, w1, w2, bn1, bn2, eps, emulate_bf16):
    """Eval-mode forward. If emulate_bf16, round the matmul operands to bf16 exactly as
    the kernel does (f32 accumulation), so the comparison is apples-to-apples."""
    g1, be1, m1, v1 = bn1
    g2, be2, m2, v2 = bn2
    inv1 = g1 / jnp.sqrt(v1 + eps)
    inv2 = g2 / jnp.sqrt(v2 + eps)
    b1 = (be1 - m1 * inv1)[None, :, None]
    b2 = (be2 - m2 * inv2)[None, :, None]
    w1e = inv1[:, None, None] * w1
    w2e = inv2[:, None, None] * w2
    xr = x
    if emulate_bf16:
        w1e = w1e.astype(jnp.bfloat16).astype(jnp.float32)
        w2e = w2e.astype(jnp.bfloat16).astype(jnp.float32)
        xr = x.astype(jnp.bfloat16).astype(jnp.float32)
    h = jnp.maximum(_conv1d(xr, w1e, 1, 1) + b1, 0.0)
    if emulate_bf16:
        h = h.astype(jnp.bfloat16).astype(jnp.float32)
    y = _conv1d(h, w2e, 2, 2) + b2 + x
    return jnp.maximum(y, 0.0)


if __name__ == "__main__":
    key = jax.random.PRNGKey(0)
    B, C, L = 2, 8, 16                       # inplanes = planes = 8, stride = 1
    k1, k2, k3, k4 = jax.random.split(key, 4)

    x = jax.random.normal(k1, (B, C, L), jnp.float32)

    # Xavier-uniform conv weights, matching init_layer().
    bound = float(np.sqrt(6.0 / (C * 3 + C * 3)))
    w1 = jax.random.uniform(k2, (C, C, 3), jnp.float32, -bound, bound)
    w2 = jax.random.uniform(k3, (C, C, 3), jnp.float32, -bound, bound)

    # BatchNorm params per module init: bn1 gamma=1, beta=0; bn2 gamma=0, beta=0.
    # Fresh running stats mean=0, var=1; eps=1e-5.
    bn1 = (jnp.ones((C,)), jnp.zeros((C,)), jnp.zeros((C,)), jnp.ones((C,)))
    bn2 = (jnp.zeros((C,)), jnp.zeros((C,)), jnp.zeros((C,)), jnp.ones((C,)))
    eps = 1e-5

    out = resnet_basic_block_wav1d(x, w1, w2, *bn1, *bn2, eps)
    jax.block_until_ready(out)
    ref = _ref_forward(x, w1, w2, bn1, bn2, eps, emulate_bf16=True)
    np.testing.assert_allclose(np.asarray(out), np.asarray(ref), rtol=1e-4, atol=1e-4)

    # Second check: nonzero bn2 gamma (conv2 exercised), L not a multiple of the forced
    # 128-lane tile (partial edge block + halo strips + boundary masks all exercised).
    L2 = 300
    x2 = jax.random.normal(k4, (B, C, L2), jnp.float32)
    bn2_nz = (jnp.full((C,), 0.7, jnp.float32), jnp.zeros((C,)),
              jnp.zeros((C,)), jnp.ones((C,)))
    out2 = resnet_basic_block_wav1d(x2, w1, w2, *bn1, *bn2_nz, eps, lt=128)
    jax.block_until_ready(out2)
    ref2 = _ref_forward(x2, w1, w2, bn1, bn2_nz, eps, emulate_bf16=True)
    np.testing.assert_allclose(np.asarray(out2), np.asarray(ref2), rtol=1e-4, atol=1e-4)
    # Loose sanity bound against the pure-f32 reference (bf16-matmul approximation).
    ref2_f32 = _ref_forward(x2, w1, w2, bn1, bn2_nz, eps, emulate_bf16=False)
    np.testing.assert_allclose(np.asarray(out2), np.asarray(ref2_f32), rtol=1e-1, atol=1e-1)

    print("KERNEL_OK")
</pallas_src>

<mosaic_0001>
module attributes {stable_mosaic.version = 11 : i64} {
  func.func @_block_kernel(%arg0: i32, %arg1: i32, %arg2: memref<1x8x16xf32, #tpu.memory_space<vmem>>, %arg3: memref<1x1x8x6xf32, #tpu.memory_space<vmem>>, %arg4: memref<3x8x8xbf16, #tpu.memory_space<vmem>>, %arg5: memref<3x8x8xbf16, #tpu.memory_space<vmem>>, %arg6: memref<8x1xf32, #tpu.memory_space<vmem>>, %arg7: memref<8x1xf32, #tpu.memory_space<vmem>>, %arg8: memref<1x8x16xf32, #tpu.memory_space<vmem>>) attributes {dimension_semantics = [#tpu.dimension_semantics<parallel>, #tpu.dimension_semantics<parallel>], iteration_bounds = array<i64: 2, 1>, scalar_prefetch = 0 : i64, scratch_operands = 0 : i64, tpu.core_type = #tpu.core_type<tc>, window_params = [{transform_indices = @transform_0, window_bounds = array<i64: 1, 8, 16>}, {transform_indices = @transform_1, window_bounds = array<i64: 1, 1, 8, 6>}, {pipeline_mode = #tpu.pipeline_mode<synchronous>, transform_indices = @transform_2, window_bounds = array<i64: 3, 8, 8>}, {pipeline_mode = #tpu.pipeline_mode<synchronous>, transform_indices = @transform_3, window_bounds = array<i64: 3, 8, 8>}, {pipeline_mode = #tpu.pipeline_mode<synchronous>, transform_indices = @transform_4, window_bounds = array<i64: 8, 1>}, {pipeline_mode = #tpu.pipeline_mode<synchronous>, transform_indices = @transform_5, window_bounds = array<i64: 8, 1>}, {transform_indices = @transform_6, window_bounds = array<i64: 1, 8, 16>}]} {
    %c16_i32 = arith.constant 16 : i32
    %0 = arith.muli %arg1, %c16_i32 : i32
    %c0 = arith.constant 0 : index
    %c0_0 = arith.constant 0 : index
    %c0_1 = arith.constant 0 : index
    %1 = vector.load %arg2[%c0, %c0_0, %c0_1] : memref<1x8x16xf32, #tpu.memory_space<vmem>>, vector<1x8x16xf32>
    %2 = vector.shape_cast %1 : vector<1x8x16xf32> to vector<8x16xf32>
    %c0_2 = arith.constant 0 : index
    %c0_3 = arith.constant 0 : index
    %c0_4 = arith.constant 0 : index
    %c0_5 = arith.constant 0 : index
    %3 = vector.load %arg3[%c0_2, %c0_3, %c0_4, %c0_5] : memref<1x1x8x6xf32, #tpu.memory_space<vmem>>, vector<1x1x8x6xf32>
    %4 = vector.shape_cast %3 : vector<1x1x8x6xf32> to vector<8x6xf32>
    %5 = vector.extract_strided_slice %4 {offsets = [0, 0], sizes = [8, 3], strides = [1, 1]} : vector<8x6xf32> to vector<8x3xf32>
    %6 = vector.extract_strided_slice %4 {offsets = [0, 3], sizes = [8, 3], strides = [1, 1]} : vector<8x6xf32> to vector<8x3xf32>
    %7 = tpu.concatenate %5, %2, %6 in 1 : vector<8x3xf32>, vector<8x16xf32>, vector<8x3xf32> -> vector<8x22xf32>
    %8 = arith.truncf %7 : vector<8x22xf32> to vector<8x22xbf16>
    %c0_6 = arith.constant 0 : index
    %c0_7 = arith.constant 0 : index
    %c0_8 = arith.constant 0 : index
    %9 = vector.load %arg4[%c0_6, %c0_7, %c0_8] : memref<3x8x8xbf16, #tpu.memory_space<vmem>>, vector<1x8x8xbf16>
    %10 = vector.shape_cast %9 : vector<1x8x8xbf16> to vector<8x8xbf16>
    %11 = vector.extract_strided_slice %8 {offsets = [0, 0], sizes = [8, 20], strides = [1, 1]} : vector<8x22xbf16> to vector<8x20xbf16>
    %cst = arith.constant dense<0.000000e+00> : vector<8x20xf32>
    %12 = tpu.matmul %10, %11, %cst {dimension_numbers = #tpu.dot_dimension_numbers<[1], [0], [0], [1], [0, 0, 1, 1], [], []>} : vector<8x8xbf16>, vector<8x20xbf16>, vector<8x20xf32> -> vector<8x20xf32>
    %c1 = arith.constant 1 : index
    %c0_9 = arith.constant 0 : index
    %c0_10 = arith.constant 0 : index
    %13 = vector.load %arg4[%c1, %c0_9, %c0_10] : memref<3x8x8xbf16, #tpu.memory_space<vmem>>, vector<1x8x8xbf16>
    %14 = vector.shape_cast %13 : vector<1x8x8xbf16> to vector<8x8xbf16>
    %15 = vector.extract_strided_slice %8 {offsets = [0, 1], sizes = [8, 20], strides = [1, 1]} : vector<8x22xbf16> to vector<8x20xbf16>
    %cst_11 = arith.constant dense<0.000000e+00> : vector<8x20xf32>
    %16 = tpu.matmul %14, %15, %cst_11 {dimension_numbers = #tpu.dot_dimension_numbers<[1], [0], [0], [1], [0, 0, 1, 1], [], []>} : vector<8x8xbf16>, vector<8x20xbf16>, vector<8x20xf32> -> vector<8x20xf32>
    %17 = arith.addf %12, %16 : vector<8x20xf32>
    %c2 = arith.constant 2 : index
    %c0_12 = arith.constant 0 : index
    %c0_13 = arith.constant 0 : index
    %18 = vector.load %arg4[%c2, %c0_12, %c0_13] : memref<3x8x8xbf16, #tpu.memory_space<vmem>>, vector<1x8x8xbf16>
    %19 = vector.shape_cast %18 : vector<1x8x8xbf16> to vector<8x8xbf16>
    %20 = vector.extract_strided_slice %8 {offsets = [0, 2], sizes = [8, 20], strides = [1, 1]} : vector<8x22xbf16> to vector<8x20xbf16>
    %cst_14 = arith.constant dense<0.000000e+00> : vector<8x20xf32>
    %21 = tpu.matmul %19, %20, %cst_14 {dimension_numbers = #tpu.dot_dimension_numbers<[1], [0], [0], [1], [0, 0, 1, 1], [], []>} : vector<8x8xbf16>, vector<8x20xbf16>, vector<8x20xf32> -> vector<8x20xf32>
    %22 = arith.addf %17, %21 : vector<8x20xf32>
    %c0_15 = arith.constant 0 : index
    %c0_16 = arith.constant 0 : index
    %23 = vector.load %arg6[%c0_15, %c0_16] : memref<8x1xf32, #tpu.memory_space<vmem>>, vector<8x1xf32>
    %24 = vector.broadcast %23 : vector<8x1xf32> to vector<8x20xf32>
    %25 = arith.addf %22, %24 : vector<8x20xf32>
    %cst_17 = arith.constant 0.000000e+00 : f32
    %26 = vector.broadcast %cst_17 : f32 to vector<8x20xf32>
    %27 = arith.maximumf %25, %26 : vector<8x20xf32>
    %28 = tpu.iota {dimensions = array<i32: 1>} : vector<8x20xi32>
    %c2_i32 = arith.constant 2 : i32
    %29 = arith.subi %0, %c2_i32 : i32
    %30 = vector.broadcast %29 : i32 to vector<8x20xi32>
    %31 = arith.addi %28, %30 : vector<8x20xi32>
    %c0_i32 = arith.constant 0 : i32
    %32 = vector.broadcast %c0_i32 : i32 to vector<8x20xi32>
    %33 = arith.cmpi sge, %31, %32 : vector<8x20xi32>
    %c16_i32_18 = arith.constant 16 : i32
    %34 = vector.broadcast %c16_i32_18 : i32 to vector<8x20xi32>
    %35 = arith.cmpi slt, %31, %34 : vector<8x20xi32>
    %36 = arith.andi %33, %35 : vector<8x20xi1>
    %cst_19 = arith.constant 0.000000e+00 : f32
    %37 = vector.broadcast %cst_19 : f32 to vector<8x20xf32>
    %38 = arith.select %36, %27, %37 : vector<8x20xi1>, vector<8x20xf32>
    %39 = arith.truncf %38 : vector<8x20xf32> to vector<8x20xbf16>
    %c0_20 = arith.constant 0 : index
    %c0_21 = arith.constant 0 : index
    %c0_22 = arith.constant 0 : index
    %40 = vector.load %arg5[%c0_20, %c0_21, %c0_22] : memref<3x8x8xbf16, #tpu.memory_space<vmem>>, vector<1x8x8xbf16>
    %41 = vector.shape_cast %40 : vector<1x8x8xbf16> to vector<8x8xbf16>
    %42 = vector.extract_strided_slice %39 {offsets = [0, 0], sizes = [8, 16], strides = [1, 1]} : vector<8x20xbf16> to vector<8x16xbf16>
    %cst_23 = arith.constant dense<0.000000e+00> : vector<8x16xf32>
    %43 = tpu.matmul %41, %42, %cst_23 {dimension_numbers = #tpu.dot_dimension_numbers<[1], [0], [0], [1], [0, 0, 1, 1], [], []>} : vector<8x8xbf16>, vector<8x16xbf16>, vector<8x16xf32> -> vector<8x16xf32>
    %c1_24 = arith.constant 1 : index
    %c0_25 = arith.constant 0 : index
    %c0_26 = arith.constant 0 : index
    %44 = vector.load %arg5[%c1_24, %c0_25, %c0_26] : memref<3x8x8xbf16, #tpu.memory_space<vmem>>, vector<1x8x8xbf16>
    %45 = vector.shape_cast %44 : vector<1x8x8xbf16> to vector<8x8xbf16>
    %46 = vector.extract_strided_slice %39 {offsets = [0, 2], sizes = [8, 16], strides = [1, 1]} : vector<8x20xbf16> to vector<8x16xbf16>
    %cst_27 = arith.constant dense<0.000000e+00> : vector<8x16xf32>
    %47 = tpu.matmul %45, %46, %cst_27 {dimension_numbers = #tpu.dot_dimension_numbers<[1], [0], [0], [1], [0, 0, 1, 1], [], []>} : vector<8x8xbf16>, vector<8x16xbf16>, vector<8x16xf32> -> vector<8x16xf32>
    %48 = arith.addf %43, %47 : vector<8x16xf32>
    %c2_28 = arith.constant 2 : index
    %c0_29 = arith.constant 0 : index
    %c0_30 = arith.constant 0 : index
    %49 = vector.load %arg5[%c2_28, %c0_29, %c0_30] : memref<3x8x8xbf16, #tpu.memory_space<vmem>>, vector<1x8x8xbf16>
    %50 = vector.shape_cast %49 : vector<1x8x8xbf16> to vector<8x8xbf16>
    %51 = vector.extract_strided_slice %39 {offsets = [0, 4], sizes = [8, 16], strides = [1, 1]} : vector<8x20xbf16> to vector<8x16xbf16>
    %cst_31 = arith.constant dense<0.000000e+00> : vector<8x16xf32>
    %52 = tpu.matmul %50, %51, %cst_31 {dimension_numbers = #tpu.dot_dimension_numbers<[1], [0], [0], [1], [0, 0, 1, 1], [], []>} : vector<8x8xbf16>, vector<8x16xbf16>, vector<8x16xf32> -> vector<8x16xf32>
    %53 = arith.addf %48, %52 : vector<8x16xf32>
    %c0_32 = arith.constant 0 : index
    %c0_33 = arith.constant 0 : index
    %54 = vector.load %arg7[%c0_32, %c0_33] : memref<8x1xf32, #tpu.memory_space<vmem>>, vector<8x1xf32>
    %55 = vector.broadcast %54 : vector<8x1xf32> to vector<8x16xf32>
    %56 = arith.addf %53, %55 : vector<8x16xf32>
    %57 = arith.addf %56, %2 : vector<8x16xf32>
    %cst_34 = arith.constant 0.000000e+00 : f32
    %58 = vector.broadcast %cst_34 : f32 to vector<8x16xf32>
    %59 = arith.maximumf %57, %58 : vector<8x16xf32>
    %c0_35 = arith.constant 0 : index
    %c0_36 = arith.constant 0 : index
    %c0_37 = arith.constant 0 : index
    %60 = vector.load %arg8[%c0_35, %c0_36, %c0_37] : memref<1x8x16xf32, #tpu.memory_space<vmem>>, vector<1x8x16xf32>
    %61 = vector.shape_cast %60 : vector<1x8x16xf32> to vector<8x16xf32>
    %62 = vector.shape_cast %59 : vector<8x16xf32> to vector<1x8x16xf32>
    tpu.vector_store %arg8[%c0_35, %c0_36, %c0_37], %62 {strides = array<i32>} : memref<1x8x16xf32, #tpu.memory_space<vmem>>, vector<1x8x16xf32>,
    return
  }
  func.func @transform_0(%arg0: i32, %arg1: i32) -> (i32, i32, i32) {
    %c0_i32 = arith.constant 0 : i32
    %c0_i32_0 = arith.constant 0 : i32
    return %arg0, %c0_i32, %arg1 : i32, i32, i32
  }
  func.func @transform_1(%arg0: i32, %arg1: i32) -> (i32, i32, i32, i32) {
    %c0_i32 = arith.constant 0 : i32
    %c0_i32_0 = arith.constant 0 : i32
    %c0_i32_1 = arith.constant 0 : i32
    return %arg0, %arg1, %c0_i32, %c0_i32_0 : i32, i32, i32, i32
  }
  func.func @transform_2(%arg0: i32, %arg1: i32) -> (i32, i32, i32) {
    %c0_i32 = arith.constant 0 : i32
    %c0_i32_0 = arith.constant 0 : i32
    %c0_i32_1 = arith.constant 0 : i32
    %c0_i32_2 = arith.constant 0 : i32
    return %c0_i32, %c0_i32_0, %c0_i32_1 : i32, i32, i32
  }
  func.func @transform_3(%arg0: i32, %arg1: i32) -> (i32, i32, i32) {
    %c0_i32 = arith.constant 0 : i32
    %c0_i32_0 = arith.constant 0 : i32
    %c0_i32_1 = arith.constant 0 : i32
    %c0_i32_2 = arith.constant 0 : i32
    return %c0_i32, %c0_i32_0, %c0_i32_1 : i32, i32, i32
  }
  func.func @transform_4(%arg0: i32, %arg1: i32) -> (i32, i32) {
    %c0_i32 = arith.constant 0 : i32
    %c0_i32_0 = arith.constant 0 : i32
    %c0_i32_1 = arith.constant 0 : i32
    return %c0_i32, %c0_i32_0 : i32, i32
  }
  func.func @transform_5(%arg0: i32, %arg1: i32) -> (i32, i32) {
    %c0_i32 = arith.constant 0 : i32
    %c0_i32_0 = arith.constant 0 : i32
    %c0_i32_1 = arith.constant 0 : i32
    return %c0_i32, %c0_i32_0 : i32, i32
  }
  func.func @transform_6(%arg0: i32, %arg1: i32) -> (i32, i32, i32) {
    %c0_i32 = arith.constant 0 : i32
    %c0_i32_0 = arith.constant 0 : i32
    return %arg0, %c0_i32, %arg1 : i32, i32, i32
  }
}

</mosaic_0001>

<llo_original>
// kernel: resnet_basic_block_wav1d.1
$region0: #{resnet_basic_block_wav1d.1}
  #allocation0 [shape = 'u32[]', space=smem, size = 0x4, offset = 0x4, fixed_abs, tag = 'smem constant byte address 0x4 - core index']
  #allocation1 [shape = 'u32[72,128]{1,0:T(1,128)}', space=vmem, size = 0x9000, scoped, tag = 'internal scratch']
  %s0 = inlined_call_operand.vmem [shape: f32[2,8,16], index: 0, kind: input, shape index: {}]
  %s1 = inlined_call_operand.vmem [shape: f32[2,1,8,6], index: 1, kind: input, shape index: {}]
  %s2 = inlined_call_operand.vmem [shape: bf16[3,8,8], index: 2, kind: input, shape index: {}]
  %s3 = inlined_call_operand.vmem [shape: bf16[3,8,8], index: 3, kind: input, shape index: {}]
  %s4 = inlined_call_operand.vmem [shape: f32[8,1], index: 4, kind: input, shape index: {}]
  %s5 = inlined_call_operand.vmem [shape: f32[8,1], index: 5, kind: input, shape index: {}]
  %s6 = inlined_call_operand.hbm [shape: f32[2,8,16], index: 6, kind: output, shape index: {}]
  %s7 = sld [smem:[#allocation0]]
  $region57: #{resnet_basic_block_wav1d.1} parent=0
    _
  %s9 = ssub.s32 1, %s7
  %s10 = scalar_select 0, %s9, %s7
  $region1: #{resnet_basic_block_wav1d.1} parent=0
    #allocation2 [shape = 'u8[8192]{0}', space=vmem, size = 0x2000, scoped, tag = 'output window, operand 0']
    #allocation3 [shape = 's32[2]{0}', space=sflag, size = 0x8, scoped, tag = 'scoped memory for resnet_basic_block_wav1d.1']
    %11 = vsyncpa [#allocation3], 0
    %s12 = scalar_lea.sflag [#allocation3], 1
    %13 = vsyncpa %s12, 0
    loop: start=0, step=1, limit=4
    $region2: #{resnet_basic_block_wav1d.1} parent=1 // loop_pre_header
      _
    $region3: #{resnet_basic_block_wav1d.1} parent=1 // loop_header
      %s15 = sphi 0, %s19
      %p16 = scmp.ge.s32.totalorder %s15, 4
      %s22 = sphi 0, %s34
      %s23 = sphi 0, %s30
      %s24 = sphi 0, %s22
      %s25 = sphi 0, %s23
      %s26 = sphi 0, %s24
      %s27 = sphi 0, %s25
      %s39 = sphi 0, %s41
      %s42 = sphi 0, %s39
      %s43 = sphi 0, %s42
      %s59 = sphi 0, %s43
      %s67 = sphi 0, %s69
      %s70 = sphi 0, %s67
      %s71 = sphi 0, %s70
      %s87 = sphi 0, %s71
      %s91 = sphi 0, %s91
      %s93 = sphi 0, %s91
      %s94 = sphi 0, %s93
      %s108 = sphi 0, %s94
      %s112 = sphi 0, %s112
      %s114 = sphi 0, %s112
      %s115 = sphi 0, %s114
      %s129 = sphi 0, %s115
      %s133 = sphi 0, %s133
      %s135 = sphi 0, %s133
      %s136 = sphi 0, %s135
      %s150 = sphi 0, %s136
      %s154 = sphi 0, %s154
      %s156 = sphi 0, %s154
      %s157 = sphi 0, %s156
      %s171 = sphi 0, %s157
      %s179 = sphi 0, %s181
      %s182 = sphi 0, %s179
      %s183 = sphi 0, %s182
      %s199 = sphi 0, %s183
    $region4: #{resnet_basic_block_wav1d.1} parent=1 // loop_header_branch
      %18 = sbr.rel (%p16) target = $region8
    $region5: #{resnet_basic_block_wav1d.1} parent=1 // loop_body
      %s20 = ssub.s32 %s15, 1
      %s21 = ssub.s32 %s15, 2
      %s28 = sadd.s32 1, %s23
      %p29 = scmp.ge.s32.totalorder %s28, 1
      %s30 = scalar_select %p29, 0, %s28
      %s31 = sadd.s32 1, %s22
      %s32 = scalar_select %p29, %s31, %s22
      %p33 = scmp.ge.s32.totalorder %s32, 2
      %s34 = scalar_select %p33, 0, %s32
      %s35 = ssub.s32 %s22, %s34
      %s36 = ssub.s32 %s23, %s30
      %s37 = sor.u32 %s35, %s36
      %p38 = scmp.eq.s32.totalorder %s37, 0
      %s40 = sadd.s32 %s39, 1
      %s41 = scalar_select %p38, %s39, %s40
      %p44 = pneg %p38
      %p45 = scmp.eq.s32.totalorder %s15, 1
      %p46 = por %p44, %p45
      %p47 = scmp.ne.s32.totalorder %s39, %s42
      %p48 = scmp.eq.s32.totalorder %s15, 0
      %p49 = por %p47, %p48
      %p50 = scmp.ne.s32.totalorder %s39, %s42
      %p51 = scmp.eq.s32.totalorder %s20, 1
      %p52 = por %p50, %p51
      %p53 = scmp.ne.s32.totalorder %s42, %s43
      %p54 = scmp.eq.s32.totalorder %s20, 0
      %p55 = por %p53, %p54
      %p56 = scmp.ne.s32.totalorder %s42, %s43
      %p57 = scmp.eq.s32.totalorder %s21, 1
      %p58 = por %p56, %p57
      %p60 = scmp.ne.s32.totalorder %s43, %s59
      %p61 = scmp.eq.s32.totalorder %s21, 0
      %p62 = por %p60, %p61
      %s63 = ssub.s32 %s22, %s34
      %s64 = ssub.s32 %s23, %s30
      %s65 = sor.u32 %s63, %s64
      %p66 = scmp.eq.s32.totalorder %s65, 0
      %s68 = sadd.s32 %s67, 1
      %s69 = scalar_select %p66, %s67, %s68
      %p72 = pneg %p66
      %p73 = scmp.eq.s32.totalorder %s15, 1
      %p74 = por %p72, %p73
      %p75 = scmp.ne.s32.totalorder %s67, %s70
      %p76 = scmp.eq.s32.totalorder %s15, 0
      %p77 = por %p75, %p76
      %p78 = scmp.ne.s32.totalorder %s67, %s70
      %p79 = scmp.eq.s32.totalorder %s20, 1
      %p80 = por %p78, %p79
      %p81 = scmp.ne.s32.totalorder %s70, %s71
      %p82 = scmp.eq.s32.totalorder %s20, 0
      %p83 = por %p81, %p82
      %p84 = scmp.ne.s32.totalorder %s70, %s71
      %p85 = scmp.eq.s32.totalorder %s21, 1
      %p86 = por %p84, %p85
      %p88 = scmp.ne.s32.totalorder %s71, %s87
      %p89 = scmp.eq.s32.totalorder %s21, 0
      %p90 = por %p88, %p89
      %s92 = sadd.s32 %s91, 1
      %p95 = scmp.eq.s32.totalorder %s15, 1
      %p96 = scmp.ne.s32.totalorder %s91, %s93
      %p97 = scmp.eq.s32.totalorder %s15, 0
      %p98 = por %p96, %p97
      %p99 = scmp.ne.s32.totalorder %s91, %s93
      %p100 = scmp.eq.s32.totalorder %s20, 1
      %p101 = por %p99, %p100
      %p102 = scmp.ne.s32.totalorder %s93, %s94
      %p103 = scmp.eq.s32.totalorder %s20, 0
      %p104 = por %p102, %p103
      %p105 = scmp.ne.s32.totalorder %s93, %s94
      %p106 = scmp.eq.s32.totalorder %s21, 1
      %p107 = por %p105, %p106
      %p109 = scmp.ne.s32.totalorder %s94, %s108
      %p110 = scmp.eq.s32.totalorder %s21, 0
      %p111 = por %p109, %p110
      %s113 = sadd.s32 %s112, 1
      %p116 = scmp.eq.s32.totalorder %s15, 1
      %p117 = scmp.ne.s32.totalorder %s112, %s114
      %p118 = scmp.eq.s32.totalorder %s15, 0
      %p119 = por %p117, %p118
      %p120 = scmp.ne.s32.totalorder %s112, %s114
      %p121 = scmp.eq.s32.totalorder %s20, 1
      %p122 = por %p120, %p121
      %p123 = scmp.ne.s32.totalorder %s114, %s115
      %p124 = scmp.eq.s32.totalorder %s20, 0
      %p125 = por %p123, %p124
      %p126 = scmp.ne.s32.totalorder %s114, %s115
      %p127 = scmp.eq.s32.totalorder %s21, 1
      %p128 = por %p126, %p127
      %p130 = scmp.ne.s32.totalorder %s115, %s129
      %p131 = scmp.eq.s32.totalorder %s21, 0
      %p132 = por %p130, %p131
      %s134 = sadd.s32 %s133, 1
      %p137 = scmp.eq.s32.totalorder %s15, 1
      %p138 = scmp.ne.s32.totalorder %s133, %s135
      %p139 = scmp.eq.s32.totalorder %s15, 0
      %p140 = por %p138, %p139
      %p141 = scmp.ne.s32.totalorder %s133, %s135
      %p142 = scmp.eq.s32.totalorder %s20, 1
      %p143 = por %p141, %p142
      %p144 = scmp.ne.s32.totalorder %s135, %s136
      %p145 = scmp.eq.s32.totalorder %s20, 0
      %p146 = por %p144, %p145
      %p147 = scmp.ne.s32.totalorder %s135, %s136
      %p148 = scmp.eq.s32.totalorder %s21, 1
      %p149 = por %p147, %p148
      %p151 = scmp.ne.s32.totalorder %s136, %s150
      %p152 = scmp.eq.s32.totalorder %s21, 0
      %p153 = por %p151, %p152
      %s155 = sadd.s32 %s154, 1
      %p158 = scmp.eq.s32.totalorder %s15, 1
      %p159 = scmp.ne.s32.totalorder %s154, %s156
      %p160 = scmp.eq.s32.totalorder %s15, 0
      %p161 = por %p159, %p160
      %p162 = scmp.ne.s32.totalorder %s154, %s156
      %p163 = scmp.eq.s32.totalorder %s20, 1
      %p164 = por %p162, %p163
      %p165 = scmp.ne.s32.totalorder %s156, %s157
      %p166 = scmp.eq.s32.totalorder %s20, 0
      %p167 = por %p165, %p166
      %p168 = scmp.ne.s32.totalorder %s156, %s157
      %p169 = scmp.eq.s32.totalorder %s21, 1
      %p170 = por %p168, %p169
      %p172 = scmp.ne.s32.totalorder %s157, %s171
      %p173 = scmp.eq.s32.totalorder %s21, 0
      %p174 = por %p172, %p173
      %s175 = ssub.s32 %s22, %s34
      %s176 = ssub.s32 %s23, %s30
      %s177 = sor.u32 %s175, %s176
      %p178 = scmp.eq.s32.totalorder %s177, 0
      %s180 = sadd.s32 %s179, 1
      %s181 = scalar_select %p178, %s179, %s180
      %p184 = pneg %p178
      %p185 = scmp.eq.s32.totalorder %s15, 1
      %p186 = por %p184, %p185
      %p187 = scmp.ne.s32.totalorder %s179, %s182
      %p188 = scmp.eq.s32.totalorder %s15, 0
      %p189 = por %p187, %p188
      %p190 = scmp.ne.s32.totalorder %s179, %s182
      %p191 = scmp.eq.s32.totalorder %s20, 1
      %p192 = por %p190, %p191
      %p193 = scmp.ne.s32.totalorder %s182, %s183
      %p194 = scmp.eq.s32.totalorder %s20, 0
      %p195 = por %p193, %p194
      %p196 = scmp.ne.s32.totalorder %s182, %s183
      %p197 = scmp.eq.s32.totalorder %s21, 1
      %p198 = por %p196, %p197
      %p200 = scmp.ne.s32.totalorder %s183, %s199
      %p201 = scmp.eq.s32.totalorder %s21, 0
      %p202 = por %p200, %p201
      %p203 = scmp.le.s32.totalorder 1, %s15
      %p204 = scmp.lt.s32.totalorder %s15, 3
      %p205 = pnand %p203, %p204
      %p206 = pneg %p205
      // Predicated region
      $region9: #{resnet_basic_block_wav1d.1} parent=5 // pred_check
        _
      $region10: #{resnet_basic_block_wav1d.1} parent=5 // pred_check_branch
        %208 = sbr.rel (%p205) target = $region12
      $region11: #{resnet_basic_block_wav1d.1} parent=5 // pred_region
        %s209 = ssub.s32 %s15, 1
        // Predicated region
        $region13: #{resnet_basic_block_wav1d.1} parent=11 // pred_check
          %p210 = pneg %p104
        $region14: #{resnet_basic_block_wav1d.1} parent=11 // pred_check_branch
          %212 = sbr.rel (%p210) target = $region16
        $region15: #{resnet_basic_block_wav1d.1} parent=11 // pred_region
          _
        $region16: #{resnet_basic_block_wav1d.1} parent=11 // pred_fallthru
          _
        // Predicated region
        $region17: #{resnet_basic_block_wav1d.1} parent=11 // pred_check
          %p213 = pneg %p125
        $region18: #{resnet_basic_block_wav1d.1} parent=11 // pred_check_branch
          %215 = sbr.rel (%p213) target = $region20
        $region19: #{resnet_basic_block_wav1d.1} parent=11 // pred_region
          _
        $region20: #{resnet_basic_block_wav1d.1} parent=11 // pred_fallthru
          _
        // Predicated region
        $region21: #{resnet_basic_block_wav1d.1} parent=11 // pred_check
          %p216 = pneg %p146
        $region22: #{resnet_basic_block_wav1d.1} parent=11 // pred_check_branch
          %218 = sbr.rel (%p216) target = $region24
        $region23: #{resnet_basic_block_wav1d.1} parent=11 // pred_region
          _
        $region24: #{resnet_basic_block_wav1d.1} parent=11 // pred_fallthru
          _
        // Predicated region
        $region25: #{resnet_basic_block_wav1d.1} parent=11 // pred_check
          %p219 = pneg %p167
        $region26: #{resnet_basic_block_wav1d.1} parent=11 // pred_check_branch
          %221 = sbr.rel (%p219) target = $region28
        $region27: #{resnet_basic_block_wav1d.1} parent=11 // pred_region
          _
        $region28: #{resnet_basic_block_wav1d.1} parent=11 // pred_fallthru
          _
      $region12: #{resnet_basic_block_wav1d.1} parent=5 // pred_fallthru
        _
      %p222 = scmp.lt.s32.totalorder %s15, 2
      // Predicated region
      $region29: #{resnet_basic_block_wav1d.1} parent=5 // pred_check
        %p223 = pneg %p222
      $region30: #{resnet_basic_block_wav1d.1} parent=5 // pred_check_branch
        %225 = sbr.rel (%p223) target = $region32
      $region31: #{resnet_basic_block_wav1d.1} parent=5 // pred_region
        // Predicated region
        $region33: #{resnet_basic_block_wav1d.1} parent=31 // pred_check
          %p226 = pneg %p49
        $region34: #{resnet_basic_block_wav1d.1} parent=31 // pred_check_branch
          %228 = sbr.rel (%p226) target = $region36
        $region35: #{resnet_basic_block_wav1d.1} parent=31 // pred_region
          %p229 = scmp.lt.s32.totalorder %s22, 1
          %s230 = scalar_select %p229, %s22, 1
          %p231 = scmp.lt.s32.totalorder %s23, 0
          %s232 = scalar_select %p231, %s23, 0
          %s233 = sadd.s32 %s232, %s230
          %s234 = smul.addr %s233, 8
          %s235 = scalar_lea.vmem %s0, %s234
        $region36: #{resnet_basic_block_wav1d.1} parent=31 // pred_fallthru
          _
        // Predicated region
        $region37: #{resnet_basic_block_wav1d.1} parent=31 // pred_check
          %p236 = pneg %p77
        $region38: #{resnet_basic_block_wav1d.1} parent=31 // pred_check_branch
          %238 = sbr.rel (%p236) target = $region40
        $region39: #{resnet_basic_block_wav1d.1} parent=31 // pred_region
          %p239 = scmp.lt.s32.totalorder %s22, 1
          %s240 = scalar_select %p239, %s22, 1
          %p241 = scmp.lt.s32.totalorder %s23, 0
          %s242 = scalar_select %p241, %s23, 0
          %s243 = sadd.s32 %s242, %s240
          %s244 = smul.addr %s243, 8
          %s245 = scalar_lea.vmem %s1, %s244
        $region40: #{resnet_basic_block_wav1d.1} parent=31 // pred_fallthru
          _
      $region32: #{resnet_basic_block_wav1d.1} parent=5 // pred_fallthru
        _
      %p246 = scmp.le.s32.totalorder 1, %s15
      %p247 = scmp.lt.s32.totalorder %s15, 3
      %p248 = pnand %p246, %p247
      %p249 = pneg %p248
      // Predicated region
      $region41: #{resnet_basic_block_wav1d.1} parent=5 // pred_check
        _
      $region42: #{resnet_basic_block_wav1d.1} parent=5 // pred_check_branch
        %251 = sbr.rel (%p248) target = $region44
      $region43: #{resnet_basic_block_wav1d.1} parent=5 // pred_region
        %s252 = ssub.s32 %s15, 1
        %p253 = scmp.lt.s32.totalorder %s24, 1
        %s254 = scalar_select %p253, %s24, 1
        %p255 = scmp.lt.s32.totalorder %s25, 0
        %s256 = scalar_select %p255, %s25, 0
        %s257 = sadd.s32 %s256, %s254
        %s258 = smul.addr %s257, 8
        %s259 = scalar_lea.vmem %s0, %s258
        %p260 = pneg %p55
        %p261 = pneg %p52
        %p262 = scmp.lt.s32.totalorder %s24, 1
        %s263 = scalar_select %p262, %s24, 1
        %p264 = scmp.lt.s32.totalorder %s25, 0
        %s265 = scalar_select %p264, %s25, 0
        %s266 = sadd.s32 %s265, %s263
        %s267 = smul.addr %s266, 8
        %s268 = scalar_lea.vmem %s1, %s267
        %p269 = pneg %p83
        %p270 = pneg %p80
        %p271 = pneg %p104
        %p272 = pneg %p101
        %p273 = pneg %p125
        %p274 = pneg %p122
        %p275 = pneg %p146
        %p276 = pneg %p143
        %p277 = pneg %p167
        %p278 = pneg %p164
        %p279 = pneg %p195
        %p280 = pneg %p192
        %s281 = sand.u32 %s182, 1
        %s282 = scalar_lea.sflag [#allocation3], %s281
        %s283 = sand.u32 %s182, 1
        %s284 = smul.addr %s283, 8
        %s285 = scalar_lea.vmem [#allocation2], %s284
        %p286 = scmp.lt.s32.totalorder %s24, 1
        %s287 = scalar_select %p286, %s24, 1
        %p288 = scmp.lt.s32.totalorder %s25, 0
        %s289 = scalar_select %p288, %s25, 0
        %s290 = sadd.s32 %s289, %s287
        %s291 = smul.addr %s290, 8
        %s292 = scalar_lea.vmem %s0, %s291
        %p293 = scmp.lt.s32.totalorder %s24, 1
        %s294 = scalar_select %p293, %s24, 1
        %p295 = scmp.lt.s32.totalorder %s25, 0
        %s296 = scalar_select %p295, %s25, 0
        %s297 = sadd.s32 %s296, %s294
        %s298 = smul.addr %s297, 8
        %s299 = scalar_lea.vmem %s1, %s298
        %s301 = smul.u32 %s25, 16
        %v302 = vld [vmem:[%s292] sm:$0xff]
        %v303 = vld [vmem:[%s299] sm:$0xff]
        %305 = vrot.lane.b32.xlu0 %v302, 3
        %v306 = vpop.permute.xlu0 %305
        %309 = vrot.lane.b32.xlu0 %v303, 16
        %v310 = vpop.permute.xlu0 %309
        %vm312 = vcmask 23552
        %v313 = vsel %vm312, %v303, %v306
        %vm314 = vcmask 154624
        %v315 = vsel %vm314, %v313, %v310
        %v316 = vpack.c.bf16 %v315, %v315
        %v317 = vld [vmem:[%s2] sm:$0xf]
        %s318 = scalar_lea.vmem %s2, 4
        %v319 = vld [vmem:[%s318] sm:$0xf]
        %v321 = vunpack.c.l.b16 %v316
        %v322 = vpack.c.b16 %v321, %v321
        %323 = vrot.lane.b32.xlu0 %v322, 127
        %v324 = vpop.permute.xlu0 %323
        %vm325 = vcmask 64512
        %v327 = vsel %vm325, %v319, 0
        %vm329 = vcmask 1043456
        %v331 = vsel %vm329, %v324, 0
        %333 = vmatpush.bf16.msra.mxu0 0
        %334 = vmatpush.bf16.msra.mxu0 0
        %335 = vmatpush.bf16.msra.mxu0 0
        %336 = vmatpush.bf16.msra.mxu0 0
        %337 = vmatpush.bf16.msra.mxu0 0
        %338 = vmatpush.bf16.msra.mxu0 0
        %339 = vmatpush.bf16.msra.mxu0 0
        %340 = vmatpush.bf16.msra.mxu0 %v331
        %341 = vmatmul.bf16.gmra.mxu0 %v327
        %v342 = vpop.f32.mrf.mxu0
        %v343 = vadd.f32 0.0, %v342
        %v344 = vpop.f32.mrf.mxu0
        %345 = vdwg.mxu0
        %v347 = vsel %vm325, %v317, 0
        %v350 = vsel %vm329, %v316, 0
        %352 = vmatpush.bf16.msra.mxu0 0
        %353 = vmatpush.bf16.msra.mxu0 0
        %354 = vmatpush.bf16.msra.mxu0 0
        %355 = vmatpush.bf16.msra.mxu0 0
        %356 = vmatpush.bf16.msra.mxu0 0
        %357 = vmatpush.bf16.msra.mxu0 0
        %358 = vmatpush.bf16.msra.mxu0 0
        %359 = vmatpush.bf16.msra.mxu0 %v350
        %360 = vmatmul.bf16.gmra.mxu0 %v347
        %v361 = vpop.f32.mrf.mxu0
        %v362 = vadd.f32 %v343, %v361
        %v363 = vpop.f32.mrf.mxu0
        %364 = vdwg.mxu0
        %s365 = scalar_lea.vmem %s2, 8
        %v366 = vld [vmem:[%s365] sm:$0xf]
        %367 = vrot.lane.b32.xlu0 %v322, 126
        %v368 = vpop.permute.xlu0 %367
        %v370 = vsel %vm325, %v366, 0
        %v373 = vsel %vm329, %v368, 0
        %375 = vmatpush.bf16.msra.mxu0 0
        %376 = vmatpush.bf16.msra.mxu0 0
        %377 = vmatpush.bf16.msra.mxu0 0
        %378 = vmatpush.bf16.msra.mxu0 0
        %379 = vmatpush.bf16.msra.mxu0 0
        %380 = vmatpush.bf16.msra.mxu0 0
        %381 = vmatpush.bf16.msra.mxu0 0
        %382 = vmatpush.bf16.msra.mxu0 %v373
        %383 = vmatmul.bf16.gmra.mxu0 %v370
        %v384 = vpop.f32.mrf.mxu0
        %v385 = vadd.f32 0.0, %v384
        %v386 = vpop.f32.mrf.mxu0
        %387 = vdwg.mxu0
        %v388 = vadd.f32 %v362, %v385
        %v389 = vld [vmem:[%s4] sm:$0xff]
        %391 = vset.pattern.permute.xlu0 0
        %392 = vperm.xlu0 %391, %v389
        %v393 = vpop.permute.xlu0 %392
        %v395 = vadd.f32 %v388, %v393
        %v396 = vmax.f32 %v395, 0.0
        %v397 = vlaneseq
        %v398 = vand.u32 %v397, 127
        %s399 = ssub.s32 %s301, 2
        %v400 = vstv %s399
        %v401 = vadd.s32 %v398, %v400
        %vm402 = vcmp.ge.s32.totalorder %v401, 0
        %vm403 = vcmp.lt.s32.totalorder %v401, 16
        %vm404 = vmand %vm402, %vm403
        %v405 = vsel %vm404, %v396, 0.0
        %v406 = vpack.c.bf16 %v405, %v405
        %v407 = vld [vmem:[%s3] sm:$0xf]
        %s408 = scalar_lea.vmem %s3, 4
        %v409 = vld [vmem:[%s408] sm:$0xf]
        %v411 = vunpack.c.l.b16 %v406
        %v412 = vpack.c.b16 %v411, %v411
        %413 = vrot.lane.b32.xlu0 %v412, 126
        %v414 = vpop.permute.xlu0 %413
        %v416 = vsel %vm325, %v409, 0
        %v419 = vsel %vm329, %v414, 0
        %421 = vmatpush.bf16.msra.mxu0 0
        %422 = vmatpush.bf16.msra.mxu0 0
        %423 = vmatpush.bf16.msra.mxu0 0
        %424 = vmatpush.bf16.msra.mxu0 0
        %425 = vmatpush.bf16.msra.mxu0 0
        %426 = vmatpush.bf16.msra.mxu0 0
        %427 = vmatpush.bf16.msra.mxu0 0
        %428 = vmatpush.bf16.msra.mxu0 %v419
        %429 = vmatmul.bf16.gmra.mxu0 %v416
        %v430 = vpop.f32.mrf.mxu0
        %v431 = vadd.f32 0.0, %v430
        %v432 = vpop.f32.mrf.mxu0
        %433 = vdwg.mxu0
        %v435 = vsel %vm325, %v407, 0
        %v438 = vsel %vm329, %v406, 0
        %440 = vmatpush.bf16.msra.mxu0 0
        %441 = vmatpush.bf16.msra.mxu0 0
        %442 = vmatpush.bf16.msra.mxu0 0
        %443 = vmatpush.bf16.msra.mxu0 0
        %444 = vmatpush.bf16.msra.mxu0 0
        %445 = vmatpush.bf16.msra.mxu0 0
        %446 = vmatpush.bf16.msra.mxu0 0
        %447 = vmatpush.bf16.msra.mxu0 %v438
        %448 = vmatmul.bf16.gmra.mxu0 %v435
        %v449 = vpop.f32.mrf.mxu0
        %v450 = vadd.f32 %v431, %v449
        %v451 = vpop.f32.mrf.mxu0
        %452 = vdwg.mxu0
        %s453 = scalar_lea.vmem %s3, 8
        %v454 = vld [vmem:[%s453] sm:$0xf]
        %455 = vrot.lane.b32.xlu0 %v412, 124
        %v456 = vpop.permute.xlu0 %455
        %v458 = vsel %vm325, %v454, 0
        %v461 = vsel %vm329, %v456, 0
        %463 = vmatpush.bf16.msra.mxu0 0
        %464 = vmatpush.bf16.msra.mxu0 0
        %465 = vmatpush.bf16.msra.mxu0 0
        %466 = vmatpush.bf16.msra.mxu0 0
        %467 = vmatpush.bf16.msra.mxu0 0
        %468 = vmatpush.bf16.msra.mxu0 0
        %469 = vmatpush.bf16.msra.mxu0 0
        %470 = vmatpush.bf16.msra.mxu0 %v461
        %471 = vmatmul.bf16.gmra.mxu0 %v458
        %v472 = vpop.f32.mrf.mxu0
        %v473 = vadd.f32 0.0, %v472
        %v474 = vpop.f32.mrf.mxu0
        %475 = vdwg.mxu0
        %v476 = vadd.f32 %v450, %v473
        %v477 = vld [vmem:[%s5] sm:$0xff]
        %479 = vset.pattern.permute.xlu0 0
        %480 = vperm.xlu0 %479, %v477
        %v481 = vpop.permute.xlu0 %480
        %v483 = vadd.f32 %v476, %v481
        %v484 = vadd.f32 %v483, %v302
        %v485 = vmax.f32 %v484, 0.0
        %vm486 = vcmask 130048
        %487 = vst.msk [vmem:[%s285] sm:$0xff] %vm486, %v485
        %s488 = sand.u32 %s182, 1
        %s489 = scalar_lea.sflag [#allocation3], %s488
        %s490 = sand.u32 %s182, 1
        %s491 = smul.addr %s490, 8
        %s492 = scalar_lea.vmem [#allocation2], %s491
        // Predicated region
        $region45: #{resnet_basic_block_wav1d.1} parent=43 // pred_check
          %p493 = pneg %p192
        $region46: #{resnet_basic_block_wav1d.1} parent=43 // pred_check_branch
          %495 = sbr.rel (%p493) target = $region48
        $region47: #{resnet_basic_block_wav1d.1} parent=43 // pred_region
          %497 = vsyncadd %s489, 0
          %s498 = sadd.s32 %s25, %s24
          %s499 = smul.addr %s498, 8
          %s500 = scalar_lea.hbm %s6, %s499
          %s502 = sshll.u32 %s492, 4
          %s503 = int_to_ptr.vmem [resolvable:$true] %s502
          %s504 = sshll.u32 %s500, 4
          %s505 = int_to_ptr.hbm [resolvable:$true] %s504
          %507 = dma.vmem_to_hbm [thread:$0]  %s503, 128, %s505, %s489
        $region48: #{resnet_basic_block_wav1d.1} parent=43 // pred_fallthru
          _
      $region44: #{resnet_basic_block_wav1d.1} parent=5 // pred_fallthru
        _
      %p508 = scmp.le.s32.totalorder 2, %s15
      // Predicated region
      $region49: #{resnet_basic_block_wav1d.1} parent=5 // pred_check
        %p509 = pneg %p508
      $region50: #{resnet_basic_block_wav1d.1} parent=5 // pred_check_branch
        %511 = sbr.rel (%p509) target = $region52
      $region51: #{resnet_basic_block_wav1d.1} parent=5 // pred_region
        %s512 = ssub.s32 %s15, 2
        // Predicated region
        $region53: #{resnet_basic_block_wav1d.1} parent=51 // pred_check
          %p513 = pneg %p198
        $region54: #{resnet_basic_block_wav1d.1} parent=51 // pred_check_branch
          %515 = sbr.rel (%p513) target = $region56
        $region55: #{resnet_basic_block_wav1d.1} parent=51 // pred_region
          %s516 = sand.u32 %s183, 1
          %s517 = scalar_lea.sflag [#allocation3], %s516
          %s518 = sand.u32 %s183, 1
          %s519 = smul.addr %s518, 8
          %s520 = scalar_lea.vmem [#allocation2], %s519
          %522 = dma.done %s517, 128
        $region56: #{resnet_basic_block_wav1d.1} parent=51 // pred_fallthru
          _
      $region52: #{resnet_basic_block_wav1d.1} parent=5 // pred_fallthru
        _
    $region6: #{resnet_basic_block_wav1d.1} parent=1 // loop_footer
      %s19 = sadd.s32 1, %s15
    $region7: #{resnet_basic_block_wav1d.1} parent=1 // loop_footer_branch
      %14 = sbr.rel target = $region3
    $region8: #{resnet_basic_block_wav1d.1} parent=1 // loop_exit
      _
    %523 = vsyncpa [#allocation3], 1
    %s524 = scalar_lea.sflag [#allocation3], 1
    %525 = vsyncpa %s524, 1

</llo_original>
